<compile_context>
chip_gen: v5e
topology: v5e:2x2
jax: 0.10.0
libtpu: 0.0.40
codegen_flags: <defaults>
</compile_context>

<pallas_src>
import jax
import jax.numpy as jnp
from jax.experimental import pallas as pl
from jax.experimental.pallas import tpu as pltpu


def _round_up(x, m):
    return (x + m - 1) // m * m


def _choose_h_tile(Ho, Wop, Cin, Coutp):
    """Pick the output-row tile so one grid step's working set (with double buffering)
    stays well under the 48 MiB scoped-VMEM limit and under v7x's 64 MiB physical."""
    bytes_per_row = (
        2 * (Wop + 2) * Cin * 2        # input block (bf16), x2 double buffer
        + 2 * Wop * Coutp * 2          # output block (bf16), x2 double buffer
        + 2 * Wop * 9 * Cin * 2        # im2col LHS value (bf16), allow a spare copy
        + Wop * Coutp * 4              # f32 MXU result before the bf16 cast
    )
    budget = 24 * 1024 * 1024
    th = max(1, min(Ho, budget // max(1, bytes_per_row)))
    th = min(th, max(1, 4096 // Wop))  # ~4k rows/step amortizes per-step overhead fine
    return th


def _pool_conv3x3_kernel(x_ref, w_ref, o_ref):
    # x_ref: (1, Th+2, Wop+2, Cin)  bf16 halo'd pooled tile (halo pre-padded in HBM)
    # w_ref: (9*Cin, Coutp)         bf16, 3x3 taps flattened into the contraction dim
    # o_ref: (1, Th*Wop, Coutp)     bf16 output tile
    _, th_p2, wop_p2, cin = x_ref.shape
    th, wop = th_p2 - 2, wop_p2 - 2

    x = x_ref[0]                                          # (Th+2, Wop+2, Cin)
    # im2col: nine shifted (Th, Wop, Cin) views -> one (Th*Wop, 9*Cin) LHS so the whole
    # 3x3 conv is a single K = 9*Cin MXU contraction (not nine tiny K=Cin dots).
    taps = [x[dy:dy + th, dx:dx + wop, :] for dy in range(3) for dx in range(3)]
    lhs = jnp.concatenate(taps, axis=-1)                  # (Th, Wop, 9*Cin)
    lhs = lhs.reshape(th * wop, 9 * cin)                  # free relayout: Wop % 16 == 0

    acc = jnp.dot(lhs, w_ref[...], preferred_element_type=jnp.float32)
    o_ref[0] = acc.astype(o_ref.dtype)                    # bf16 writeback, f32 accumulate


def downsample(x_nchw, weight_oihw):
    """Forward of Downsample: bilinear x0.5 (== exact 2x2 mean pool) then 3x3 conv,
    no bias.  x_nchw: (N, Cin, H, W); weight_oihw: (Cout, Cin, 3, 3).
    Returns (N, Cout, H//2, W//2) in x_nchw.dtype (internally bf16 compute/writeback)."""
    N, Cin, H, W = x_nchw.shape
    Cout = weight_oihw.shape[0]
    Ho, Wo = H // 2, W // 2

    # --- glue pass 1: 2x2 mean pool + NCHW->NHWC + bf16 + halo/alignment zero-pad -----
    x_even = x_nchw[:, :, :2 * Ho, :2 * Wo]
    pooled = x_even.reshape(N, Cin, Ho, 2, Wo, 2).mean(axis=(3, 5))          # f32 pool
    pooled = jnp.transpose(pooled, (0, 2, 3, 1)).astype(jnp.bfloat16)        # (N,Ho,Wo,Cin)

    Wop = _round_up(Wo, 16)                                 # bf16 sublane tile alignment
    Coutp = _round_up(Cout, 128) if Cout >= 64 else Cout    # lane-dense only when cheap
    Th = _choose_h_tile(Ho, Wop, Cin, Coutp)
    n_tiles = -(-Ho // Th)
    Ho_pad = n_tiles * Th

    # 1-px zero halo (the conv's "same" padding) + alignment rows/cols whose outputs are
    # later dropped.  The halo lives in HBM now: the kernel has no scratch zero/copy work.
    padded = jnp.pad(pooled, ((0, 0), (1, 1 + Ho_pad - Ho), (1, 1 + Wop - Wo), (0, 0)))
    # (N, Ho_pad+2, Wop+2, Cin)

    # Pre-gather halo'd H tiles (tile r = padded rows [r*Th, r*Th+Th+2)) so BlockSpec
    # blocks never need to overlap.
    tiles = [padded[:, r * Th:r * Th + Th + 2] for r in range(n_tiles)]
    x_tiles = jnp.stack(tiles, axis=1).reshape(N * n_tiles, Th + 2, Wop + 2, Cin)

    # Weights: OIHW -> HWIO -> (9*Cin, Coutp), zero-padded along Cout, bf16.
    w2d = jnp.transpose(weight_oihw, (2, 3, 1, 0)).reshape(9 * Cin, Cout)
    w2d = jnp.pad(w2d, ((0, 0), (0, Coutp - Cout))).astype(jnp.bfloat16)

    M = Th * Wop
    out = pl.pallas_call(
        _pool_conv3x3_kernel,
        out_shape=jax.ShapeDtypeStruct((N * n_tiles, M, Coutp), jnp.bfloat16),
        grid_spec=pltpu.PrefetchScalarGridSpec(
            num_scalar_prefetch=0,
            grid=(N * n_tiles,),
            in_specs=[
                # TODO(synk): if the activation DMA is still exposed at real sizes, add
                # pipeline_mode=pl.Buffered(3) on this spec.
                pl.BlockSpec((1, Th + 2, Wop + 2, Cin), lambda i: (i, 0, 0, 0)),
                pl.BlockSpec((9 * Cin, Coutp), lambda i: (0, 0)),   # constant -> fetched once
            ],
            out_specs=pl.BlockSpec((1, M, Coutp), lambda i: (i, 0, 0)),
        ),
        compiler_params=pltpu.CompilerParams(
            dimension_semantics=("parallel",),     # independent tiles -> megacore-shardable
            vmem_limit_bytes=48 * 1024 * 1024,     # > scoped defaults, < v7x physical VMEM
        ),
    )(x_tiles, w2d)

    # --- glue pass 2: strip alignment padding, back to the PyTorch NCHW convention -----
    out = out.reshape(N, Ho_pad, Wop, Coutp)[:, :Ho, :Wo, :Cout]
    return jnp.transpose(out, (0, 3, 1, 2)).astype(x_nchw.dtype)


if __name__ == "__main__":
    key = jax.random.PRNGKey(0)
    k_x, k_w = jax.random.split(key)

    # Module config: Downsample(n_feat=4) -> Cin=4, Cout=8.
    n_feat = 4
    N, H, W = 2, 16, 16
    Cin, Cout = n_feat, 2 * n_feat

    x = jax.random.normal(k_x, (N, Cin, H, W), dtype=jnp.float32)
    weight = jax.random.normal(k_w, (Cout, Cin, 3, 3), dtype=jnp.float32) * 0.1

    out = jax.block_until_ready(downsample(x, weight))

    # Reference: exact 2x2 mean pool (== bilinear x0.5, align_corners=False) then conv.
    Ho, Wo = H // 2, W // 2
    pooled_ref = x.reshape(N, Cin, Ho, 2, Wo, 2).mean(axis=(3, 5))
    ref = jax.lax.conv_general_dilated(
        pooled_ref, weight, window_strides=(1, 1), padding=((1, 1), (1, 1)),
        dimension_numbers=("NCHW", "OIHW", "NCHW"))
    ref = jax.block_until_ready(ref)

    assert out.shape == (N, Cout, Ho, Wo), out.shape
    # bf16 activations/weights/writeback with f32 MXU accumulation -> relaxed tolerance.
    assert jnp.allclose(out, ref, atol=2e-2, rtol=2e-2), "mismatch vs reference pool+conv"
    print("KERNEL_OK")
</pallas_src>

<mosaic_0001>
module attributes {stable_mosaic.version = 11 : i64} {
  func.func @_pool_conv3x3_kernel(%arg0: i32, %arg1: memref<1x10x18x4xbf16, #tpu.memory_space<vmem>>, %arg2: memref<36x8xbf16, #tpu.memory_space<vmem>>, %arg3: memref<1x128x8xbf16, #tpu.memory_space<vmem>>) attributes {dimension_semantics = [#tpu.dimension_semantics<parallel>], iteration_bounds = array<i64: 2>, scalar_prefetch = 0 : i64, scratch_operands = 0 : i64, tpu.core_type = #tpu.core_type<tc>, window_params = [{transform_indices = @transform_0, window_bounds = array<i64: 1, 10, 18, 4>}, {pipeline_mode = #tpu.pipeline_mode<synchronous>, transform_indices = @transform_1, window_bounds = array<i64: 36, 8>}, {transform_indices = @transform_2, window_bounds = array<i64: 1, 128, 8>}]} {
    %c0 = arith.constant 0 : index
    %c0_0 = arith.constant 0 : index
    %c0_1 = arith.constant 0 : index
    %c0_2 = arith.constant 0 : index
    %0 = vector.load %arg1[%c0, %c0_0, %c0_1, %c0_2] : memref<1x10x18x4xbf16, #tpu.memory_space<vmem>>, vector<1x10x18x4xbf16>
    %1 = vector.shape_cast %0 : vector<1x10x18x4xbf16> to vector<10x18x4xbf16>
    %2 = vector.extract_strided_slice %1 {offsets = [0, 0, 0], sizes = [8, 16, 4], strides = [1, 1, 1]} : vector<10x18x4xbf16> to vector<8x16x4xbf16>
    %3 = vector.extract_strided_slice %1 {offsets = [0, 1, 0], sizes = [8, 16, 4], strides = [1, 1, 1]} : vector<10x18x4xbf16> to vector<8x16x4xbf16>
    %4 = vector.extract_strided_slice %1 {offsets = [0, 2, 0], sizes = [8, 16, 4], strides = [1, 1, 1]} : vector<10x18x4xbf16> to vector<8x16x4xbf16>
    %5 = vector.extract_strided_slice %1 {offsets = [1, 0, 0], sizes = [8, 16, 4], strides = [1, 1, 1]} : vector<10x18x4xbf16> to vector<8x16x4xbf16>
    %6 = vector.extract_strided_slice %1 {offsets = [1, 1, 0], sizes = [8, 16, 4], strides = [1, 1, 1]} : vector<10x18x4xbf16> to vector<8x16x4xbf16>
    %7 = vector.extract_strided_slice %1 {offsets = [1, 2, 0], sizes = [8, 16, 4], strides = [1, 1, 1]} : vector<10x18x4xbf16> to vector<8x16x4xbf16>
    %8 = vector.extract_strided_slice %1 {offsets = [2, 0, 0], sizes = [8, 16, 4], strides = [1, 1, 1]} : vector<10x18x4xbf16> to vector<8x16x4xbf16>
    %9 = vector.extract_strided_slice %1 {offsets = [2, 1, 0], sizes = [8, 16, 4], strides = [1, 1, 1]} : vector<10x18x4xbf16> to vector<8x16x4xbf16>
    %10 = vector.extract_strided_slice %1 {offsets = [2, 2, 0], sizes = [8, 16, 4], strides = [1, 1, 1]} : vector<10x18x4xbf16> to vector<8x16x4xbf16>
    %11 = tpu.concatenate %2, %3, %4, %5, %6, %7, %8, %9, %10 in 2 : vector<8x16x4xbf16>, vector<8x16x4xbf16>, vector<8x16x4xbf16>, vector<8x16x4xbf16>, vector<8x16x4xbf16>, vector<8x16x4xbf16>, vector<8x16x4xbf16>, vector<8x16x4xbf16>, vector<8x16x4xbf16> -> vector<8x16x36xbf16>
    %12 = vector.shape_cast %11 : vector<8x16x36xbf16> to vector<128x36xbf16>
    %c0_3 = arith.constant 0 : index
    %c0_4 = arith.constant 0 : index
    %13 = vector.load %arg2[%c0_3, %c0_4] : memref<36x8xbf16, #tpu.memory_space<vmem>>, vector<36x8xbf16>
    %cst = arith.constant dense<0.000000e+00> : vector<128x8xf32>
    %14 = tpu.matmul %12, %13, %cst {dimension_numbers = #tpu.dot_dimension_numbers<[1], [0], [0], [1], [0, 0, 1, 1], [], []>} : vector<128x36xbf16>, vector<36x8xbf16>, vector<128x8xf32> -> vector<128x8xf32>
    %15 = arith.truncf %14 : vector<128x8xf32> to vector<128x8xbf16>
    %c0_5 = arith.constant 0 : index
    %c0_6 = arith.constant 0 : index
    %c0_7 = arith.constant 0 : index
    %16 = vector.load %arg3[%c0_5, %c0_6, %c0_7] : memref<1x128x8xbf16, #tpu.memory_space<vmem>>, vector<1x128x8xbf16>
    %17 = vector.shape_cast %16 : vector<1x128x8xbf16> to vector<128x8xbf16>
    %18 = vector.shape_cast %15 : vector<128x8xbf16> to vector<1x128x8xbf16>
    tpu.vector_store %arg3[%c0_5, %c0_6, %c0_7], %18 {strides = array<i32>} : memref<1x128x8xbf16, #tpu.memory_space<vmem>>, vector<1x128x8xbf16>,
    return
  }
  func.func @transform_0(%arg0: i32) -> (i32, i32, i32, i32) {
    %c0_i32 = arith.constant 0 : i32
    %c0_i32_0 = arith.constant 0 : i32
    %c0_i32_1 = arith.constant 0 : i32
    %c0_i32_2 = arith.constant 0 : i32
    return %arg0, %c0_i32, %c0_i32_0, %c0_i32_1 : i32, i32, i32, i32
  }
  func.func @transform_1(%arg0: i32) -> (i32, i32) {
    %c0_i32 = arith.constant 0 : i32
    %c0_i32_0 = arith.constant 0 : i32
    %c0_i32_1 = arith.constant 0 : i32
    return %c0_i32, %c0_i32_0 : i32, i32
  }
  func.func @transform_2(%arg0: i32) -> (i32, i32, i32) {
    %c0_i32 = arith.constant 0 : i32
    %c0_i32_0 = arith.constant 0 : i32
    %c0_i32_1 = arith.constant 0 : i32
    return %arg0, %c0_i32, %c0_i32_0 : i32, i32, i32
  }
}

</mosaic_0001>

<llo_original>
// kernel: tpu_custom_call.1
$region0: #{tpu_custom_call.1}
  #allocation0 [shape = 'u32[]', space=smem, size = 0x4, offset = 0x4, fixed_abs, tag = 'smem constant byte address 0x4 - core index']
  #allocation1 [shape = 'u32[72,128]{1,0:T(1,128)}', space=vmem, size = 0x9000, scoped, tag = 'internal scratch']
  %s0 = inlined_call_operand.vmem [shape: bf16[2,10,18,4], index: 0, kind: input, shape index: {}]
  %s1 = inlined_call_operand.vmem [shape: bf16[36,8], index: 1, kind: input, shape index: {}]
  %s2 = inlined_call_operand.vmem [shape: bf16[2,128,8], index: 2, kind: output, shape index: {}]
  %s3 = sld [smem:[#allocation0]]
  $region41: #{tpu_custom_call.1} parent=0
    _
  %s5 = ssub.s32 1, %s3
  %s6 = scalar_select 0, %s5, %s3
  loop: start=0, step=1, limit=4
  $region2: #{tpu_custom_call.1} parent=0 // loop_pre_header
    _
  $region3: #{tpu_custom_call.1} parent=0 // loop_header
    %s8 = sphi 0, %s12
    %p9 = scmp.ge.s32.totalorder %s8, 4
    %s18 = sphi 0, %s20
    %s21 = sphi 0, %s18
    %s22 = sphi 0, %s21
    %s38 = sphi 0, %s22
    %s42 = sphi 0, %s42
    %s44 = sphi 0, %s42
    %s45 = sphi 0, %s44
    %s59 = sphi 0, %s45
    %s65 = sphi 0, %s67
    %s68 = sphi 0, %s65
    %s69 = sphi 0, %s68
    %s85 = sphi 0, %s69
  $region4: #{tpu_custom_call.1} parent=0 // loop_header_branch
    %11 = sbr.rel (%p9) target = $region8
  $region5: #{tpu_custom_call.1} parent=0 // loop_body
    %s13 = ssub.s32 %s8, 1
    %s14 = ssub.s32 %s8, 2
    %s15 = sadd.s32 %s8, 1
    %s16 = ssub.s32 %s8, %s15
    %p17 = scmp.eq.s32.totalorder %s16, 0
    %s19 = sadd.s32 %s18, 1
    %s20 = scalar_select %p17, %s18, %s19
    %p23 = pneg %p17
    %p24 = scmp.eq.s32.totalorder %s8, 1
    %p25 = por %p23, %p24
    %p26 = scmp.ne.s32.totalorder %s18, %s21
    %p27 = scmp.eq.s32.totalorder %s8, 0
    %p28 = por %p26, %p27
    %p29 = scmp.ne.s32.totalorder %s18, %s21
    %p30 = scmp.eq.s32.totalorder %s13, 1
    %p31 = por %p29, %p30
    %p32 = scmp.ne.s32.totalorder %s21, %s22
    %p33 = scmp.eq.s32.totalorder %s13, 0
    %p34 = por %p32, %p33
    %p35 = scmp.ne.s32.totalorder %s21, %s22
    %p36 = scmp.eq.s32.totalorder %s14, 1
    %p37 = por %p35, %p36
    %p39 = scmp.ne.s32.totalorder %s22, %s38
    %p40 = scmp.eq.s32.totalorder %s14, 0
    %p41 = por %p39, %p40
    %s43 = sadd.s32 %s42, 1
    %p46 = scmp.eq.s32.totalorder %s8, 1
    %p47 = scmp.ne.s32.totalorder %s42, %s44
    %p48 = scmp.eq.s32.totalorder %s8, 0
    %p49 = por %p47, %p48
    %p50 = scmp.ne.s32.totalorder %s42, %s44
    %p51 = scmp.eq.s32.totalorder %s13, 1
    %p52 = por %p50, %p51
    %p53 = scmp.ne.s32.totalorder %s44, %s45
    %p54 = scmp.eq.s32.totalorder %s13, 0
    %p55 = por %p53, %p54
    %p56 = scmp.ne.s32.totalorder %s44, %s45
    %p57 = scmp.eq.s32.totalorder %s14, 1
    %p58 = por %p56, %p57
    %p60 = scmp.ne.s32.totalorder %s45, %s59
    %p61 = scmp.eq.s32.totalorder %s14, 0
    %p62 = por %p60, %p61
    %s63 = ssub.s32 %s8, %s15
    %p64 = scmp.eq.s32.totalorder %s63, 0
    %s66 = sadd.s32 %s65, 1
    %s67 = scalar_select %p64, %s65, %s66
    %p70 = pneg %p64
    %p71 = scmp.eq.s32.totalorder %s8, 1
    %p72 = por %p70, %p71
    %p73 = scmp.ne.s32.totalorder %s65, %s68
    %p74 = scmp.eq.s32.totalorder %s8, 0
    %p75 = por %p73, %p74
    %p76 = scmp.ne.s32.totalorder %s65, %s68
    %p77 = scmp.eq.s32.totalorder %s13, 1
    %p78 = por %p76, %p77
    %p79 = scmp.ne.s32.totalorder %s68, %s69
    %p80 = scmp.eq.s32.totalorder %s13, 0
    %p81 = por %p79, %p80
    %p82 = scmp.ne.s32.totalorder %s68, %s69
    %p83 = scmp.eq.s32.totalorder %s14, 1
    %p84 = por %p82, %p83
    %p86 = scmp.ne.s32.totalorder %s69, %s85
    %p87 = scmp.eq.s32.totalorder %s14, 0
    %p88 = por %p86, %p87
    %p89 = scmp.le.s32.totalorder 1, %s8
    %p90 = scmp.lt.s32.totalorder %s8, 3
    %p91 = pnand %p89, %p90
    %p92 = pneg %p91
    // Predicated region
    $region9: #{tpu_custom_call.1} parent=5 // pred_check
      _
    $region10: #{tpu_custom_call.1} parent=5 // pred_check_branch
      %94 = sbr.rel (%p91) target = $region12
    $region11: #{tpu_custom_call.1} parent=5 // pred_region
      %s95 = ssub.s32 %s8, 1
      // Predicated region
      $region13: #{tpu_custom_call.1} parent=11 // pred_check
        %p96 = pneg %p55
      $region14: #{tpu_custom_call.1} parent=11 // pred_check_branch
        %98 = sbr.rel (%p96) target = $region16
      $region15: #{tpu_custom_call.1} parent=11 // pred_region
        _
      $region16: #{tpu_custom_call.1} parent=11 // pred_fallthru
        _
    $region12: #{tpu_custom_call.1} parent=5 // pred_fallthru
      _
    %p99 = scmp.lt.s32.totalorder %s8, 2
    // Predicated region
    $region17: #{tpu_custom_call.1} parent=5 // pred_check
      %p100 = pneg %p99
    $region18: #{tpu_custom_call.1} parent=5 // pred_check_branch
      %102 = sbr.rel (%p100) target = $region20
    $region19: #{tpu_custom_call.1} parent=5 // pred_region
      // Predicated region
      $region21: #{tpu_custom_call.1} parent=19 // pred_check
        %p103 = pneg %p28
      $region22: #{tpu_custom_call.1} parent=19 // pred_check_branch
        %105 = sbr.rel (%p103) target = $region24
      $region23: #{tpu_custom_call.1} parent=19 // pred_region
        %p106 = scmp.lt.s32.totalorder %s8, 1
        %s107 = scalar_select %p106, %s8, 1
        %s108 = smul.addr %s107, 30
        %s109 = smul.addr %s108, 4
        %s110 = scalar_lea.vmem %s0, %s109
      $region24: #{tpu_custom_call.1} parent=19 // pred_fallthru
        _
    $region20: #{tpu_custom_call.1} parent=5 // pred_fallthru
      _
    %p111 = scmp.le.s32.totalorder 1, %s8
    %p112 = scmp.lt.s32.totalorder %s8, 3
    %p113 = pnand %p111, %p112
    %p114 = pneg %p113
    // Predicated region
    $region25: #{tpu_custom_call.1} parent=5 // pred_check
      _
    $region26: #{tpu_custom_call.1} parent=5 // pred_check_branch
      %116 = sbr.rel (%p113) target = $region28
    $region27: #{tpu_custom_call.1} parent=5 // pred_region
      %s117 = ssub.s32 %s8, 1
      %p118 = scmp.lt.s32.totalorder %s13, 1
      %s119 = scalar_select %p118, %s13, 1
      %s120 = smul.addr %s119, 30
      %s121 = smul.addr %s120, 4
      %s122 = scalar_lea.vmem %s0, %s121
      %p123 = pneg %p34
      %p124 = pneg %p31
      %p125 = pneg %p55
      %p126 = pneg %p52
      %p127 = pneg %p81
      %p128 = pneg %p78
      %p129 = scmp.lt.s32.totalorder %s13, 1
      %s130 = scalar_select %p129, %s13, 1
      %s131 = smul.addr %s130, 16
      %s132 = smul.addr %s131, 4
      %s133 = scalar_lea.vmem %s2, %s132
      %p134 = scmp.lt.s32.totalorder %s13, 1
      %s135 = scalar_select %p134, %s13, 1
      %s136 = smul.addr %s135, 30
      %s137 = smul.addr %s136, 4
      %s138 = scalar_lea.vmem %s0, %s137
      %p139 = scmp.lt.s32.totalorder %s13, 1
      %s140 = scalar_select %p139, %s13, 1
      %s141 = smul.addr %s140, 16
      %s142 = smul.addr %s141, 4
      %s143 = scalar_lea.vmem %s2, %s142
      %v145 = vld [vmem:[%s138] sm:$0xf]
      %v146 = vld [vmem:[%s138 + $0x4] sm:$0xf]
      %v147 = vld [vmem:[%s138 + $0x8] sm:$0x1]
      %v148 = vld [vmem:[%s138 + $0xc] sm:$0xf]
      %v149 = vld [vmem:[%s138 + $0x10] sm:$0xf]
      %v150 = vld [vmem:[%s138 + $0x14] sm:$0x1]
      %v151 = vld [vmem:[%s138 + $0x18] sm:$0xf]
      %v152 = vld [vmem:[%s138 + $0x1c] sm:$0xf]
      %v153 = vld [vmem:[%s138 + $0x20] sm:$0x1]
      %v154 = vld [vmem:[%s138 + $0x24] sm:$0xf]
      %v155 = vld [vmem:[%s138 + $0x28] sm:$0xf]
      %v156 = vld [vmem:[%s138 + $0x2c] sm:$0x1]
      %v157 = vld [vmem:[%s138 + $0x30] sm:$0xf]
      %v158 = vld [vmem:[%s138 + $0x34] sm:$0xf]
      %v159 = vld [vmem:[%s138 + $0x38] sm:$0x1]
      %v160 = vld [vmem:[%s138 + $0x3c] sm:$0xf]
      %v161 = vld [vmem:[%s138 + $0x40] sm:$0xf]
      %v162 = vld [vmem:[%s138 + $0x44] sm:$0x1]
      %v163 = vld [vmem:[%s138 + $0x48] sm:$0xf]
      %v164 = vld [vmem:[%s138 + $0x4c] sm:$0xf]
      %v165 = vld [vmem:[%s138 + $0x50] sm:$0x1]
      %v166 = vld [vmem:[%s138 + $0x54] sm:$0xf]
      %v167 = vld [vmem:[%s138 + $0x58] sm:$0xf]
      %v168 = vld [vmem:[%s138 + $0x5c] sm:$0x1]
      %v169 = vld [vmem:[%s138 + $0x60] sm:$0xf]
      %v170 = vld [vmem:[%s138 + $0x64] sm:$0xf]
      %v171 = vld [vmem:[%s138 + $0x68] sm:$0x1]
      %v172 = vld [vmem:[%s138 + $0x6c] sm:$0xf]
      %v173 = vld [vmem:[%s138 + $0x70] sm:$0xf]
      %v174 = vld [vmem:[%s138 + $0x74] sm:$0x1]
      %v191 = vunpack.c.l.b16 %v145
      %v192 = vunpack.c.l.b16 %v146
      %v193 = vunpack.c.l.b16 %v148
      %v194 = vunpack.c.l.b16 %v149
      %v195 = vunpack.c.l.b16 %v151
      %v196 = vunpack.c.l.b16 %v152
      %v197 = vunpack.c.l.b16 %v154
      %v198 = vunpack.c.l.b16 %v155
      %v199 = vunpack.c.l.b16 %v157
      %v200 = vunpack.c.l.b16 %v158
      %v201 = vunpack.c.l.b16 %v160
      %v202 = vunpack.c.l.b16 %v161
      %v203 = vunpack.c.l.b16 %v163
      %v204 = vunpack.c.l.b16 %v164
      %v205 = vunpack.c.l.b16 %v166
      %v206 = vunpack.c.l.b16 %v167
      %v207 = vpack.c.b16 %v192, %v191
      %v208 = vpack.c.b16 %v194, %v193
      %v209 = vpack.c.b16 %v196, %v195
      %v210 = vpack.c.b16 %v198, %v197
      %v211 = vpack.c.b16 %v200, %v199
      %v212 = vpack.c.b16 %v202, %v201
      %v213 = vpack.c.b16 %v204, %v203
      %v214 = vpack.c.b16 %v206, %v205
      %v223 = vunpack.c.l.b16 %v147
      %v224 = vunpack.c.l.b16 %v150
      %v225 = vunpack.c.l.b16 %v153
      %v226 = vunpack.c.l.b16 %v156
      %v227 = vunpack.c.l.b16 %v159
      %v228 = vunpack.c.l.b16 %v162
      %v229 = vunpack.c.l.b16 %v165
      %v230 = vunpack.c.l.b16 %v168
      %v231 = vpack.c.b16 %v223, %v223
      %v232 = vpack.c.b16 %v224, %v224
      %v233 = vpack.c.b16 %v225, %v225
      %v234 = vpack.c.b16 %v226, %v226
      %v235 = vpack.c.b16 %v227, %v227
      %v236 = vpack.c.b16 %v228, %v228
      %v237 = vpack.c.b16 %v229, %v229
      %v238 = vpack.c.b16 %v230, %v230
      %vm239 = vsmask.f32 7424
      %v241 = vshrl.u32 %v207, 16
      %v243 = vshll.u32 %v207, 16
      %v245 = vrot.slane %v243, 1
      %v246 = vor.u32 %v241, %v245
      %v248 = vshll.u32 %v231, 16
      %v250 = vrot.slane %v248, 1
      %v251 = vsel %vm239, %v246, %v250
      %v253 = vshrl.u32 %v208, 16
      %v255 = vshll.u32 %v208, 16
      %v257 = vrot.slane %v255, 1
      %v258 = vor.u32 %v253, %v257
      %v260 = vshll.u32 %v232, 16
      %v262 = vrot.slane %v260, 1
      %v263 = vsel %vm239, %v258, %v262
      %v265 = vshrl.u32 %v209, 16
      %v267 = vshll.u32 %v209, 16
      %v269 = vrot.slane %v267, 1
      %v270 = vor.u32 %v265, %v269
      %v272 = vshll.u32 %v233, 16
      %v274 = vrot.slane %v272, 1
      %v275 = vsel %vm239, %v270, %v274
      %v277 = vshrl.u32 %v210, 16
      %v279 = vshll.u32 %v210, 16
      %v281 = vrot.slane %v279, 1
      %v282 = vor.u32 %v277, %v281
      %v284 = vshll.u32 %v234, 16
      %v286 = vrot.slane %v284, 1
      %v287 = vsel %vm239, %v282, %v286
      %v289 = vshrl.u32 %v211, 16
      %v291 = vshll.u32 %v211, 16
      %v293 = vrot.slane %v291, 1
      %v294 = vor.u32 %v289, %v293
      %v296 = vshll.u32 %v235, 16
      %v298 = vrot.slane %v296, 1
      %v299 = vsel %vm239, %v294, %v298
      %v301 = vshrl.u32 %v212, 16
      %v303 = vshll.u32 %v212, 16
      %v305 = vrot.slane %v303, 1
      %v306 = vor.u32 %v301, %v305
      %v308 = vshll.u32 %v236, 16
      %v310 = vrot.slane %v308, 1
      %v311 = vsel %vm239, %v306, %v310
      %v313 = vshrl.u32 %v213, 16
      %v315 = vshll.u32 %v213, 16
      %v317 = vrot.slane %v315, 1
      %v318 = vor.u32 %v313, %v317
      %v320 = vshll.u32 %v237, 16
      %v322 = vrot.slane %v320, 1
      %v323 = vsel %vm239, %v318, %v322
      %v325 = vshrl.u32 %v214, 16
      %v327 = vshll.u32 %v214, 16
      %v329 = vrot.slane %v327, 1
      %v330 = vor.u32 %v325, %v329
      %v332 = vshll.u32 %v238, 16
      %v334 = vrot.slane %v332, 1
      %v335 = vsel %vm239, %v330, %v334
      %336 = vrot.lane.b32.xlu0 %v251, 4
      %v337 = vpop.permute.xlu0 %336
      %338 = vrot.lane.b32.xlu0 %v263, 4
      %v339 = vpop.permute.xlu0 %338
      %340 = vrot.lane.b32.xlu0 %v275, 4
      %v341 = vpop.permute.xlu0 %340
      %342 = vrot.lane.b32.xlu0 %v287, 4
      %v343 = vpop.permute.xlu0 %342
      %344 = vrot.lane.b32.xlu0 %v299, 4
      %v345 = vpop.permute.xlu0 %344
      %346 = vrot.lane.b32.xlu0 %v311, 4
      %v347 = vpop.permute.xlu0 %346
      %348 = vrot.lane.b32.xlu0 %v323, 4
      %v349 = vpop.permute.xlu0 %348
      %350 = vrot.lane.b32.xlu0 %v335, 4
      %v351 = vpop.permute.xlu0 %350
      %vm352 = vcmask 1046528
      %v353 = vrot.slane %v207, 1
      %v354 = vrot.slane %v231, 1
      %v355 = vsel %vm352, %v353, %v354
      %v356 = vrot.slane %v208, 1
      %v357 = vrot.slane %v232, 1
      %v358 = vsel %vm352, %v356, %v357
      %v359 = vrot.slane %v209, 1
      %v360 = vrot.slane %v233, 1
      %v361 = vsel %vm352, %v359, %v360
      %v362 = vrot.slane %v210, 1
      %v363 = vrot.slane %v234, 1
      %v364 = vsel %vm352, %v362, %v363
      %v365 = vrot.slane %v211, 1
      %v366 = vrot.slane %v235, 1
      %v367 = vsel %vm352, %v365, %v366
      %v368 = vrot.slane %v212, 1
      %v369 = vrot.slane %v236, 1
      %v370 = vsel %vm352, %v368, %v369
      %v371 = vrot.slane %v213, 1
      %v372 = vrot.slane %v237, 1
      %v373 = vsel %vm352, %v371, %v372
      %v374 = vrot.slane %v214, 1
      %v375 = vrot.slane %v238, 1
      %v376 = vsel %vm352, %v374, %v375
      %377 = vrot.lane.b32.xlu0 %v355, 8
      %v378 = vpop.permute.xlu0 %377
      %379 = vrot.lane.b32.xlu0 %v358, 8
      %v380 = vpop.permute.xlu0 %379
      %381 = vrot.lane.b32.xlu0 %v361, 8
      %v382 = vpop.permute.xlu0 %381
      %383 = vrot.lane.b32.xlu0 %v364, 8
      %v384 = vpop.permute.xlu0 %383
      %385 = vrot.lane.b32.xlu0 %v367, 8
      %v386 = vpop.permute.xlu0 %385
      %387 = vrot.lane.b32.xlu0 %v370, 8
      %v388 = vpop.permute.xlu0 %387
      %389 = vrot.lane.b32.xlu0 %v373, 8
      %v390 = vpop.permute.xlu0 %389
      %391 = vrot.lane.b32.xlu0 %v376, 8
      %v392 = vpop.permute.xlu0 %391
      %v395 = vunpack.c.l.b16 %v169
      %v396 = vunpack.c.l.b16 %v170
      %v397 = vpack.c.b16 %v396, %v395
      %398 = vrot.lane.b32.xlu0 %v208, 12
      %v399 = vpop.permute.xlu0 %398
      %400 = vrot.lane.b32.xlu0 %v209, 12
      %v401 = vpop.permute.xlu0 %400
      %402 = vrot.lane.b32.xlu0 %v210, 12
      %v403 = vpop.permute.xlu0 %402
      %404 = vrot.lane.b32.xlu0 %v211, 12
      %v405 = vpop.permute.xlu0 %404
      %406 = vrot.lane.b32.xlu0 %v212, 12
      %v407 = vpop.permute.xlu0 %406
      %408 = vrot.lane.b32.xlu0 %v213, 12
      %v409 = vpop.permute.xlu0 %408
      %410 = vrot.lane.b32.xlu0 %v214, 12
      %v411 = vpop.permute.xlu0 %410
      %412 = vrot.lane.b32.xlu0 %v397, 12
      %v413 = vpop.permute.xlu0 %412
      %v415 = vunpack.c.l.b16 %v171
      %v416 = vpack.c.b16 %v415, %v415
      %v418 = vshrl.u32 %v397, 16
      %v420 = vshll.u32 %v397, 16
      %v422 = vrot.slane %v420, 1
      %v423 = vor.u32 %v418, %v422
      %v425 = vshll.u32 %v416, 16
      %v427 = vrot.slane %v425, 1
      %v428 = vsel %vm239, %v423, %v427
      %429 = vrot.lane.b32.xlu0 %v263, 16
      %v430 = vpop.permute.xlu0 %429
      %431 = vrot.lane.b32.xlu0 %v275, 16
      %v432 = vpop.permute.xlu0 %431
      %433 = vrot.lane.b32.xlu0 %v287, 16
      %v434 = vpop.permute.xlu0 %433
      %435 = vrot.lane.b32.xlu0 %v299, 16
      %v436 = vpop.permute.xlu0 %435
      %437 = vrot.lane.b32.xlu0 %v311, 16
      %v438 = vpop.permute.xlu0 %437
      %439 = vrot.lane.b32.xlu0 %v323, 16
      %v440 = vpop.permute.xlu0 %439
      %441 = vrot.lane.b32.xlu0 %v335, 16
      %v442 = vpop.permute.xlu0 %441
      %443 = vrot.lane.b32.xlu0 %v428, 16
      %v444 = vpop.permute.xlu0 %443
      %v445 = vrot.slane %v397, 1
      %v446 = vrot.slane %v416, 1
      %v447 = vsel %vm352, %v445, %v446
      %448 = vrot.lane.b32.xlu0 %v358, 20
      %v449 = vpop.permute.xlu0 %448
      %450 = vrot.lane.b32.xlu0 %v361, 20
      %v451 = vpop.permute.xlu0 %450
      %452 = vrot.lane.b32.xlu0 %v364, 20
      %v453 = vpop.permute.xlu0 %452
      %454 = vrot.lane.b32.xlu0 %v367, 20
      %v455 = vpop.permute.xlu0 %454
      %456 = vrot.lane.b32.xlu0 %v370, 20
      %v457 = vpop.permute.xlu0 %456
      %458 = vrot.lane.b32.xlu0 %v373, 20
      %v459 = vpop.permute.xlu0 %458
      %460 = vrot.lane.b32.xlu0 %v376, 20
      %v461 = vpop.permute.xlu0 %460
      %462 = vrot.lane.b32.xlu0 %v447, 20
      %v463 = vpop.permute.xlu0 %462
      %v466 = vunpack.c.l.b16 %v172
      %v467 = vunpack.c.l.b16 %v173
      %v468 = vpack.c.b16 %v467, %v466
      %469 = vrot.lane.b32.xlu0 %v209, 24
      %v470 = vpop.permute.xlu0 %469
      %471 = vrot.lane.b32.xlu0 %v210, 24
      %v472 = vpop.permute.xlu0 %471
      %473 = vrot.lane.b32.xlu0 %v211, 24
      %v474 = vpop.permute.xlu0 %473
      %475 = vrot.lane.b32.xlu0 %v212, 24
      %v476 = vpop.permute.xlu0 %475
      %477 = vrot.lane.b32.xlu0 %v213, 24
      %v478 = vpop.permute.xlu0 %477
      %479 = vrot.lane.b32.xlu0 %v214, 24
      %v480 = vpop.permute.xlu0 %479
      %481 = vrot.lane.b32.xlu0 %v397, 24
      %v482 = vpop.permute.xlu0 %481
      %483 = vrot.lane.b32.xlu0 %v468, 24
      %v484 = vpop.permute.xlu0 %483
      %v486 = vunpack.c.l.b16 %v174
      %v487 = vpack.c.b16 %v486, %v486
      %v489 = vshrl.u32 %v468, 16
      %v491 = vshll.u32 %v468, 16
      %v493 = vrot.slane %v491, 1
      %v494 = vor.u32 %v489, %v493
      %v496 = vshll.u32 %v487, 16
      %v498 = vrot.slane %v496, 1
      %v499 = vsel %vm239, %v494, %v498
      %500 = vrot.lane.b32.xlu0 %v275, 28
      %v501 = vpop.permute.xlu0 %500
      %502 = vrot.lane.b32.xlu0 %v287, 28
      %v503 = vpop.permute.xlu0 %502
      %504 = vrot.lane.b32.xlu0 %v299, 28
      %v505 = vpop.permute.xlu0 %504
      %506 = vrot.lane.b32.xlu0 %v311, 28
      %v507 = vpop.permute.xlu0 %506
      %508 = vrot.lane.b32.xlu0 %v323, 28
      %v509 = vpop.permute.xlu0 %508
      %510 = vrot.lane.b32.xlu0 %v335, 28
      %v511 = vpop.permute.xlu0 %510
      %512 = vrot.lane.b32.xlu0 %v428, 28
      %v513 = vpop.permute.xlu0 %512
      %514 = vrot.lane.b32.xlu0 %v499, 28
      %v515 = vpop.permute.xlu0 %514
      %v516 = vrot.slane %v468, 1
      %v517 = vrot.slane %v487, 1
      %v518 = vsel %vm352, %v516, %v517
      %519 = vrot.lane.b32.xlu0 %v361, 32
      %v520 = vpop.permute.xlu0 %519
      %521 = vrot.lane.b32.xlu0 %v364, 32
      %v522 = vpop.permute.xlu0 %521
      %523 = vrot.lane.b32.xlu0 %v367, 32
      %v524 = vpop.permute.xlu0 %523
      %525 = vrot.lane.b32.xlu0 %v370, 32
      %v526 = vpop.permute.xlu0 %525
      %527 = vrot.lane.b32.xlu0 %v373, 32
      %v528 = vpop.permute.xlu0 %527
      %529 = vrot.lane.b32.xlu0 %v376, 32
      %v530 = vpop.permute.xlu0 %529
      %531 = vrot.lane.b32.xlu0 %v447, 32
      %v532 = vpop.permute.xlu0 %531
      %533 = vrot.lane.b32.xlu0 %v518, 32
      %v534 = vpop.permute.xlu0 %533
      %vm535 = vcmask 31744
      %v537 = vsel %vm535, %v207, %v337
      %v539 = vsel %vm535, %v208, %v339
      %v541 = vsel %vm535, %v209, %v341
      %v543 = vsel %vm535, %v210, %v343
      %v545 = vsel %vm535, %v211, %v345
      %v547 = vsel %vm535, %v212, %v347
      %v549 = vsel %vm535, %v213, %v349
      %v551 = vsel %vm535, %v214, %v351
      %vm552 = vcmask 64512
      %v554 = vsel %vm552, %v537, %v378
      %v556 = vsel %vm552, %v539, %v380
      %v558 = vsel %vm552, %v541, %v382
      %v560 = vsel %vm552, %v543, %v384
      %v562 = vsel %vm552, %v545, %v386
      %v564 = vsel %vm552, %v547, %v388
      %v566 = vsel %vm552, %v549, %v390
      %v568 = vsel %vm552, %v551, %v392
      %vm569 = vcmask 97280
      %v571 = vsel %vm569, %v554, %v399
      %v573 = vsel %vm569, %v556, %v401
      %v575 = vsel %vm569, %v558, %v403
      %v577 = vsel %vm569, %v560, %v405
      %v579 = vsel %vm569, %v562, %v407
      %v581 = vsel %vm569, %v564, %v409
      %v583 = vsel %vm569, %v566, %v411
      %v585 = vsel %vm569, %v568, %v413
      %vm586 = vcmask 130048
      %v588 = vsel %vm586, %v571, %v430
      %v590 = vsel %vm586, %v573, %v432
      %v592 = vsel %vm586, %v575, %v434
      %v594 = vsel %vm586, %v577, %v436
      %v596 = vsel %vm586, %v579, %v438
      %v598 = vsel %vm586, %v581, %v440
      %v600 = vsel %vm586, %v583, %v442
      %v602 = vsel %vm586, %v585, %v444
      %vm603 = vcmask 162816
      %v605 = vsel %vm603, %v588, %v449
      %v607 = vsel %vm603, %v590, %v451
      %v609 = vsel %vm603, %v592, %v453
      %v611 = vsel %vm603, %v594, %v455
      %v613 = vsel %vm603, %v596, %v457
      %v615 = vsel %vm603, %v598, %v459
      %v617 = vsel %vm603, %v600, %v461
      %v619 = vsel %vm603, %v602, %v463
      %vm620 = vcmask 195584
      %v622 = vsel %vm620, %v605, %v470
      %v624 = vsel %vm620, %v607, %v472
      %v626 = vsel %vm620, %v609, %v474
      %v628 = vsel %vm620, %v611, %v476
      %v630 = vsel %vm620, %v613, %v478
      %v632 = vsel %vm620, %v615, %v480
      %v634 = vsel %vm620, %v617, %v482
      %v636 = vsel %vm620, %v619, %v484
      %vm637 = vcmask 228352
      %v639 = vsel %vm637, %v622, %v501
      %v641 = vsel %vm637, %v624, %v503
      %v643 = vsel %vm637, %v626, %v505
      %v645 = vsel %vm637, %v628, %v507
      %v647 = vsel %vm637, %v630, %v509
      %v649 = vsel %vm637, %v632, %v511
      %v651 = vsel %vm637, %v634, %v513
      %v653 = vsel %vm637, %v636, %v515
      %vm654 = vcmask 261120
      %v656 = vsel %vm654, %v639, %v520
      %v658 = vsel %vm654, %v641, %v522
      %v660 = vsel %vm654, %v643, %v524
      %v662 = vsel %vm654, %v645, %v526
      %v664 = vsel %vm654, %v647, %v528
      %v666 = vsel %vm654, %v649, %v530
      %v668 = vsel %vm654, %v651, %v532
      %v670 = vsel %vm654, %v653, %v534
      %v671 = vld [vmem:[%s1] sm:$0xf]
      %v672 = vld [vmem:[%s1 + $0x4] sm:$0xf]
      %v673 = vld [vmem:[%s1 + $0x8] sm:$0xf]
      %v674 = vld [vmem:[%s1 + $0xc] sm:$0xf]
      %v675 = vld [vmem:[%s1 + $0x10] sm:$0x3]
      %v681 = vunpack.c.l.b16 %v671
      %v682 = vunpack.c.l.b16 %v672
      %v683 = vunpack.c.l.b16 %v673
      %v684 = vunpack.c.l.b16 %v674
      %v685 = vunpack.c.l.b16 %v675
      %v686 = vpack.c.b16 %v682, %v681
      %v687 = vpack.c.b16 %v684, %v683
      %v688 = vpack.c.b16 %v685, %v685
      %vm691 = vcmask 293888
      %v692 = vsel %vm691, %v656, 0
      %v694 = vsel %vm691, %v658, 0
      %v696 = vsel %vm691, %v660, 0
      %v698 = vsel %vm691, %v662, 0
      %v700 = vsel %vm691, %v664, 0
      %v702 = vsel %vm691, %v666, 0
      %v704 = vsel %vm691, %v668, 0
      %v706 = vsel %vm691, %v670, 0
      %vm708 = vcmask 1041408
      %v710 = vsel %vm708, %v688, 0
      %712 = vmatpush.bf16.msra.mxu0 0
      %713 = vmatpush.bf16.msra.mxu0 0
      %714 = vmatpush.bf16.msra.mxu0 0
      %715 = vmatpush.bf16.msra.mxu0 0
      %716 = vmatpush.bf16.msra.mxu0 0
      %717 = vmatpush.bf16.msra.mxu0 %v710
      %718 = vmatpush.bf16.msra.mxu0 %v687
      %719 = vmatpush.bf16.msra.mxu0 %v686
      %720 = vmatmul.bf16.gmra.mxu0 %v692
      %v721 = vpop.f32.mrf.mxu0
      %v722 = vadd.f32 0.0, %v721
      %v723 = vpop.f32.mrf.mxu0
      %v724 = vadd.f32 0.0, %v723
      %725 = vmatmul.bf16.gmra.mxu0 %v694
      %v726 = vpop.f32.mrf.mxu0
      %v727 = vadd.f32 0.0, %v726
      %v728 = vpop.f32.mrf.mxu0
      %v729 = vadd.f32 0.0, %v728
      %730 = vmatmul.bf16.gmra.mxu0 %v696
      %v731 = vpop.f32.mrf.mxu0
      %v732 = vadd.f32 0.0, %v731
      %v733 = vpop.f32.mrf.mxu0
      %v734 = vadd.f32 0.0, %v733
      %735 = vmatmul.bf16.gmra.mxu0 %v698
      %v736 = vpop.f32.mrf.mxu0
      %v737 = vadd.f32 0.0, %v736
      %v738 = vpop.f32.mrf.mxu0
      %v739 = vadd.f32 0.0, %v738
      %740 = vmatmul.bf16.gmra.mxu0 %v700
      %v741 = vpop.f32.mrf.mxu0
      %v742 = vadd.f32 0.0, %v741
      %v743 = vpop.f32.mrf.mxu0
      %v744 = vadd.f32 0.0, %v743
      %745 = vmatmul.bf16.gmra.mxu0 %v702
      %v746 = vpop.f32.mrf.mxu0
      %v747 = vadd.f32 0.0, %v746
      %v748 = vpop.f32.mrf.mxu0
      %v749 = vadd.f32 0.0, %v748
      %750 = vmatmul.bf16.gmra.mxu0 %v704
      %v751 = vpop.f32.mrf.mxu0
      %v752 = vadd.f32 0.0, %v751
      %v753 = vpop.f32.mrf.mxu0
      %v754 = vadd.f32 0.0, %v753
      %755 = vmatmul.bf16.gmra.mxu0 %v706
      %v756 = vpop.f32.mrf.mxu0
      %v757 = vadd.f32 0.0, %v756
      %v758 = vpop.f32.mrf.mxu0
      %v759 = vadd.f32 0.0, %v758
      %760 = vdwg.mxu0
      %v761 = vpack.c.bf16 %v722, %v722
      %v762 = vpack.c.bf16 %v724, %v724
      %v763 = vpack.c.bf16 %v727, %v727
      %v764 = vpack.c.bf16 %v729, %v729
      %v765 = vpack.c.bf16 %v732, %v732
      %v766 = vpack.c.bf16 %v734, %v734
      %v767 = vpack.c.bf16 %v737, %v737
      %v768 = vpack.c.bf16 %v739, %v739
      %v769 = vpack.c.bf16 %v742, %v742
      %v770 = vpack.c.bf16 %v744, %v744
      %v771 = vpack.c.bf16 %v747, %v747
      %v772 = vpack.c.bf16 %v749, %v749
      %v773 = vpack.c.bf16 %v752, %v752
      %v774 = vpack.c.bf16 %v754, %v754
      %v775 = vpack.c.bf16 %v757, %v757
      %v776 = vpack.c.bf16 %v759, %v759
      %vm777 = vcmask 60416
      %778 = vst.msk [vmem:[%s143] sm:$0xf] %vm777, %v761
      %779 = vst.msk [vmem:[%s143 + $0x4] sm:$0xf] %vm777, %v762
      %780 = vst.msk [vmem:[%s143 + $0x8] sm:$0xf] %vm777, %v763
      %781 = vst.msk [vmem:[%s143 + $0xc] sm:$0xf] %vm777, %v764
      %782 = vst.msk [vmem:[%s143 + $0x10] sm:$0xf] %vm777, %v765
      %783 = vst.msk [vmem:[%s143 + $0x14] sm:$0xf] %vm777, %v766
      %784 = vst.msk [vmem:[%s143 + $0x18] sm:$0xf] %vm777, %v767
      %785 = vst.msk [vmem:[%s143 + $0x1c] sm:$0xf] %vm777, %v768
      %786 = vst.msk [vmem:[%s143 + $0x20] sm:$0xf] %vm777, %v769
      %787 = vst.msk [vmem:[%s143 + $0x24] sm:$0xf] %vm777, %v770
      %788 = vst.msk [vmem:[%s143 + $0x28] sm:$0xf] %vm777, %v771
      %789 = vst.msk [vmem:[%s143 + $0x2c] sm:$0xf] %vm777, %v772
      %790 = vst.msk [vmem:[%s143 + $0x30] sm:$0xf] %vm777, %v773
      %791 = vst.msk [vmem:[%s143 + $0x34] sm:$0xf] %vm777, %v774
      %792 = vst.msk [vmem:[%s143 + $0x38] sm:$0xf] %vm777, %v775
      %793 = vst.msk [vmem:[%s143 + $0x3c] sm:$0xf] %vm777, %v776
      %p794 = scmp.lt.s32.totalorder %s13, 1
      %s795 = scalar_select %p794, %s13, 1
      %s796 = smul.addr %s795, 16
      %s797 = smul.addr %s796, 4
      %s798 = scalar_lea.vmem %s2, %s797
      // Predicated region
      $region29: #{tpu_custom_call.1} parent=27 // pred_check
        %p799 = pneg %p78
      $region30: #{tpu_custom_call.1} parent=27 // pred_check_branch
        %801 = sbr.rel (%p799) target = $region32
      $region31: #{tpu_custom_call.1} parent=27 // pred_region
        _
      $region32: #{tpu_custom_call.1} parent=27 // pred_fallthru
        _
    $region28: #{tpu_custom_call.1} parent=5 // pred_fallthru
      _
    %p802 = scmp.le.s32.totalorder 2, %s8
    // Predicated region
    $region33: #{tpu_custom_call.1} parent=5 // pred_check
      %p803 = pneg %p802
    $region34: #{tpu_custom_call.1} parent=5 // pred_check_branch
      %805 = sbr.rel (%p803) target = $region36
    $region35: #{tpu_custom_call.1} parent=5 // pred_region
      %s806 = ssub.s32 %s8, 2
      // Predicated region
      $region37: #{tpu_custom_call.1} parent=35 // pred_check
        %p807 = pneg %p84
      $region38: #{tpu_custom_call.1} parent=35 // pred_check_branch
        %809 = sbr.rel (%p807) target = $region40
      $region39: #{tpu_custom_call.1} parent=35 // pred_region
        %p810 = scmp.lt.s32.totalorder %s14, 1
        %s811 = scalar_select %p810, %s14, 1
        %s812 = smul.addr %s811, 16
        %s813 = smul.addr %s812, 4
        %s814 = scalar_lea.vmem %s2, %s813
      $region40: #{tpu_custom_call.1} parent=35 // pred_fallthru
        _
    $region36: #{tpu_custom_call.1} parent=5 // pred_fallthru
      _
  $region6: #{tpu_custom_call.1} parent=0 // loop_footer
    %s12 = sadd.s32 1, %s8
  $region7: #{tpu_custom_call.1} parent=0 // loop_footer_branch
    %7 = sbr.rel target = $region3
  $region8: #{tpu_custom_call.1} parent=0 // loop_exit
    _

</llo_original>
